<compile_context>
chip_gen: v7x
topology: tpu7x:2x2x1
jax: 0.10.0
libtpu: 0.0.40
codegen_flags: <defaults>
</compile_context>

<pallas_src>
import functools

import jax
import jax.numpy as jnp
import numpy as np
from jax import lax
from jax.experimental import pallas as pl
from jax.experimental.pallas import tpu as pltpu


def _pick_batch_tile(B, per_elem_bytes, target_bytes=4 << 20):
    """Largest Bt dividing B with ~target (in+out) bytes per grid step,
    keeping at least 2 grid steps when B allows (v7x has 2 TensorCores)."""
    bt = max(1, min(B, target_bytes // max(per_elem_bytes, 1)))
    while bt > 1 and pl.cdiv(B, bt) < 2:
        bt -= 1
    while bt > 1 and B % bt != 0:
        bt -= 1
    return max(int(bt), 1)


def _cam_kernel(x_ref, w1_ref, b1_ref, w2_ref, b2_ref, o_ref, *, hw, bt):
    # x_ref block: (Bt, C, HWp) -- Bt batch elements per grid step.
    hwp = x_ref.shape[-1]
    xv = x_ref[...]                                       # input dtype

    # adaptive_avg_pool2d -> 1x1: zero padding contributes 0 to the sum,
    # so divide by the true spatial size (accumulate in f32).
    av = jnp.sum(xv, axis=-1, dtype=jnp.float32) * jnp.float32(1.0 / hw)

    # adaptive_max_pool2d -> 1x1: mask padded lanes before the max.
    if hwp != hw:
        lane = lax.broadcasted_iota(jnp.int32, xv.shape, 2)
        neg = jnp.asarray(jnp.finfo(xv.dtype).min, xv.dtype)
        xm = jnp.where(lane < hw, xv, neg)
    else:
        xm = xv
    mx = jnp.max(xm, axis=-1).astype(jnp.float32)         # (Bt, C)

    # Shared MLP, one pass: stack [max; avg] -> (2*Bt, C).
    pooled = jnp.concatenate([mx, av], axis=0)
    w1 = w1_ref[...].astype(jnp.float32)                  # (C, Cr)
    b1 = b1_ref[...].astype(jnp.float32)                  # (1, Cr)
    w2 = w2_ref[...].astype(jnp.float32)                  # (Cr, C)
    b2 = b2_ref[...].astype(jnp.float32)                  # (1, C)

    h = jnp.dot(pooled, w1, preferred_element_type=jnp.float32) + b1
    h = jnp.maximum(h, 0.0)                               # ReLU
    z = jnp.dot(h, w2, preferred_element_type=jnp.float32) + b2   # (2*Bt, C)

    gate = jax.nn.sigmoid(z[:bt] + z[bt:])                # (Bt, C), f32
    g = gate.astype(o_ref.dtype)

    # Re-read x from VMEM at the store site; scale in the input dtype.
    o_ref[...] = (g[:, :, None] * x_ref[...]).astype(o_ref.dtype)


def cam_forward(x_nchw, w1, b1, w2, b2):
    """x_nchw: (B, C, H, W). Returns (B, C, H, W)."""
    B, C, H, W = x_nchw.shape
    HW = H * W
    Cr = w1.shape[1]
    itemsize = jnp.dtype(x_nchw.dtype).itemsize

    # Lane-dense last dim: pad spatial up to a multiple of 128 (zero pad;
    # the kernel masks the max and divides the mean by the true HW).
    HWp = ((HW + 127) // 128) * 128
    x_flat = x_nchw.reshape(B, C, HW)
    if HWp != HW:
        x_flat = jnp.pad(x_flat, ((0, 0), (0, 0), (0, HWp - HW)))

    per_elem_bytes = 2 * C * HWp * itemsize          # in + out per batch elem
    Bt = _pick_batch_tile(B, per_elem_bytes)
    grid = (B // Bt,)

    # Double-buffered in + out blocks + weights + slack.
    blk_bytes = Bt * C * HWp * itemsize
    w_bytes = 4 * (int(w1.size) + int(w2.size) + Cr + C)
    vmem_limit = int(min(max(4 * blk_bytes + w_bytes + (2 << 20), 16 << 20),
                         64 << 20))

    b1_row = b1.reshape(1, Cr)
    b2_row = b2.reshape(1, C)

    kernel = functools.partial(_cam_kernel, hw=HW, bt=Bt)

    cost = pl.CostEstimate(
        flops=8 * B * C * Cr + 2 * B * C * HW,
        transcendentals=B * C,
        bytes_accessed=2 * B * C * HW * itemsize,
    )

    out_flat = pl.pallas_call(
        kernel,
        out_shape=jax.ShapeDtypeStruct((B, C, HWp), x_nchw.dtype),
        grid_spec=pltpu.PrefetchScalarGridSpec(
            num_scalar_prefetch=0,
            grid=grid,
            in_specs=[
                pl.BlockSpec((Bt, C, HWp), lambda b: (b, 0, 0)),
                pl.BlockSpec((C, Cr), lambda b: (0, 0)),
                pl.BlockSpec((1, Cr), lambda b: (0, 0)),
                pl.BlockSpec((Cr, C), lambda b: (0, 0)),
                pl.BlockSpec((1, C), lambda b: (0, 0)),
            ],
            out_specs=pl.BlockSpec((Bt, C, HWp), lambda b: (b, 0, 0)),
        ),
        compiler_params=pltpu.CompilerParams(
            dimension_semantics=("parallel",),
            vmem_limit_bytes=vmem_limit),
        cost_estimate=cost,
    )(x_flat, w1, b1_row, w2, b2_row)

    if HWp != HW:
        out_flat = out_flat[:, :, :HW]
    return out_flat.reshape(B, C, H, W)


def _reference(x_nchw, w1, b1, w2, b2):
    B, C, H, W = x_nchw.shape
    mx = jnp.max(x_nchw.reshape(B, C, -1), axis=-1)
    av = jnp.mean(x_nchw.reshape(B, C, -1), axis=-1)

    def mlp(v):
        h = jnp.maximum(v @ w1 + b1, 0.0)
        return h @ w2 + b2

    gate = jax.nn.sigmoid(mlp(mx) + mlp(av))
    return gate[:, :, None, None] * x_nchw


def _run_case(key, B, C, H, W, r):
    Cr = C // r
    kx, k1, kb1, k2, kb2 = jax.random.split(key, 5)
    x = jax.random.normal(kx, (B, C, H, W), dtype=jnp.float32)
    w1 = jax.random.normal(k1, (C, Cr), dtype=jnp.float32) * 0.5
    b1 = jax.random.normal(kb1, (Cr,), dtype=jnp.float32) * 0.1
    w2 = jax.random.normal(k2, (Cr, C), dtype=jnp.float32) * 0.5
    b2 = jax.random.normal(kb2, (C,), dtype=jnp.float32) * 0.1

    out = jax.block_until_ready(cam_forward(x, w1, b1, w2, b2))
    ref = _reference(x, w1, b1, w2, b2)
    np.testing.assert_allclose(np.asarray(out), np.asarray(ref),
                               rtol=1e-5, atol=1e-5)


if __name__ == "__main__":
    key = jax.random.PRNGKey(0)
    k0, k1 = jax.random.split(key)
    # lane-dense spatial (HW = 256, already a multiple of 128)
    _run_case(k0, B=2, C=8, H=16, W=16, r=4)
    # non-multiple-of-128 spatial (HW = 49) -> exercises the pad/mask path
    _run_case(k1, B=2, C=8, H=7, W=7, r=4)
    print("KERNEL_OK")
</pallas_src>

<mosaic_0001>
module attributes {stable_mosaic.version = 11 : i64} {
  func.func @_cam_kernel(%arg0: i32, %arg1: memref<1x8x256xf32, #tpu.memory_space<vmem>>, %arg2: memref<8x2xf32, #tpu.memory_space<vmem>>, %arg3: memref<1x2xf32, #tpu.memory_space<vmem>>, %arg4: memref<2x8xf32, #tpu.memory_space<vmem>>, %arg5: memref<1x8xf32, #tpu.memory_space<vmem>>, %arg6: memref<1x8x256xf32, #tpu.memory_space<vmem>>) attributes {dimension_semantics = [#tpu.dimension_semantics<parallel>], iteration_bounds = array<i64: 2>, scalar_prefetch = 0 : i64, scratch_operands = 0 : i64, tpu.core_type = #tpu.core_type<tc>, window_params = [{transform_indices = @transform_0, window_bounds = array<i64: 1, 8, 256>}, {pipeline_mode = #tpu.pipeline_mode<synchronous>, transform_indices = @transform_1, window_bounds = array<i64: 8, 2>}, {pipeline_mode = #tpu.pipeline_mode<synchronous>, transform_indices = @transform_2, window_bounds = array<i64: 1, 2>}, {pipeline_mode = #tpu.pipeline_mode<synchronous>, transform_indices = @transform_3, window_bounds = array<i64: 2, 8>}, {pipeline_mode = #tpu.pipeline_mode<synchronous>, transform_indices = @transform_4, window_bounds = array<i64: 1, 8>}, {transform_indices = @transform_5, window_bounds = array<i64: 1, 8, 256>}]} {
    %c0 = arith.constant 0 : index
    %c0_0 = arith.constant 0 : index
    %c0_1 = arith.constant 0 : index
    %0 = vector.load %arg1[%c0, %c0_0, %c0_1] : memref<1x8x256xf32, #tpu.memory_space<vmem>>, vector<1x8x256xf32>
    %cst = arith.constant dense<0.000000e+00> : vector<1x8xf32>
    %1 = vector.multi_reduction <add>, %0, %cst [2] : vector<1x8x256xf32> to vector<1x8xf32>
    %cst_2 = arith.constant 3.906250e-03 : f32
    %2 = vector.broadcast %cst_2 : f32 to vector<1x8xf32>
    %3 = arith.mulf %1, %2 : vector<1x8xf32>
    %cst_3 = arith.constant dense<0xFF800000> : vector<1x8xf32>
    %4 = vector.multi_reduction <maximumf>, %0, %cst_3 [2] : vector<1x8x256xf32> to vector<1x8xf32>
    %5 = tpu.concatenate %4, %3 in 0 : vector<1x8xf32>, vector<1x8xf32> -> vector<2x8xf32>
    %c0_4 = arith.constant 0 : index
    %c0_5 = arith.constant 0 : index
    %6 = vector.load %arg2[%c0_4, %c0_5] : memref<8x2xf32, #tpu.memory_space<vmem>>, vector<8x2xf32>
    %c0_6 = arith.constant 0 : index
    %c0_7 = arith.constant 0 : index
    %7 = vector.load %arg3[%c0_6, %c0_7] : memref<1x2xf32, #tpu.memory_space<vmem>>, vector<1x2xf32>
    %c0_8 = arith.constant 0 : index
    %c0_9 = arith.constant 0 : index
    %8 = vector.load %arg4[%c0_8, %c0_9] : memref<2x8xf32, #tpu.memory_space<vmem>>, vector<2x8xf32>
    %c0_10 = arith.constant 0 : index
    %c0_11 = arith.constant 0 : index
    %9 = vector.load %arg5[%c0_10, %c0_11] : memref<1x8xf32, #tpu.memory_space<vmem>>, vector<1x8xf32>
    %cst_12 = arith.constant dense<0.000000e+00> : vector<2x2xf32>
    %10 = tpu.matmul %5, %6, %cst_12 {dimension_numbers = #tpu.dot_dimension_numbers<[1], [0], [0], [1], [0, 0, 1, 1], [], []>} : vector<2x8xf32>, vector<8x2xf32>, vector<2x2xf32> -> vector<2x2xf32>
    %11 = vector.broadcast %7 : vector<1x2xf32> to vector<2x2xf32>
    %12 = arith.addf %10, %11 : vector<2x2xf32>
    %cst_13 = arith.constant 0.000000e+00 : f32
    %13 = vector.broadcast %cst_13 : f32 to vector<2x2xf32>
    %14 = arith.maximumf %12, %13 : vector<2x2xf32>
    %cst_14 = arith.constant dense<0.000000e+00> : vector<2x8xf32>
    %15 = tpu.matmul %14, %8, %cst_14 {dimension_numbers = #tpu.dot_dimension_numbers<[1], [0], [0], [1], [0, 0, 1, 1], [], []>} : vector<2x2xf32>, vector<2x8xf32>, vector<2x8xf32> -> vector<2x8xf32>
    %16 = vector.broadcast %9 : vector<1x8xf32> to vector<2x8xf32>
    %17 = arith.addf %15, %16 : vector<2x8xf32>
    %18 = vector.extract_strided_slice %17 {offsets = [0, 0], sizes = [1, 8], strides = [1, 1]} : vector<2x8xf32> to vector<1x8xf32>
    %19 = vector.extract_strided_slice %17 {offsets = [1, 0], sizes = [1, 8], strides = [1, 1]} : vector<2x8xf32> to vector<1x8xf32>
    %20 = arith.addf %18, %19 : vector<1x8xf32>
    %21 = arith.negf %20 : vector<1x8xf32>
    %22 = math.exp %21 : vector<1x8xf32>
    %cst_15 = arith.constant 1.000000e+00 : f32
    %23 = vector.broadcast %cst_15 : f32 to vector<1x8xf32>
    %24 = arith.addf %23, %22 : vector<1x8xf32>
    %25 = arith.divf %23, %24 : vector<1x8xf32>
    %26 = vector.shape_cast %25 : vector<1x8xf32> to vector<1x8x1xf32>
    %c0_16 = arith.constant 0 : index
    %c0_17 = arith.constant 0 : index
    %c0_18 = arith.constant 0 : index
    %27 = vector.load %arg1[%c0_16, %c0_17, %c0_18] : memref<1x8x256xf32, #tpu.memory_space<vmem>>, vector<1x8x256xf32>
    %28 = vector.broadcast %26 : vector<1x8x1xf32> to vector<1x8x256xf32>
    %29 = arith.mulf %28, %27 : vector<1x8x256xf32>
    %c0_19 = arith.constant 0 : index
    %c0_20 = arith.constant 0 : index
    %c0_21 = arith.constant 0 : index
    %30 = vector.load %arg6[%c0_19, %c0_20, %c0_21] : memref<1x8x256xf32, #tpu.memory_space<vmem>>, vector<1x8x256xf32>
    tpu.vector_store %arg6[%c0_19, %c0_20, %c0_21], %29 {strides = array<i32>} : memref<1x8x256xf32, #tpu.memory_space<vmem>>, vector<1x8x256xf32>,
    return
  }
  func.func @transform_0(%arg0: i32) -> (i32, i32, i32) {
    %c0_i32 = arith.constant 0 : i32
    %c0_i32_0 = arith.constant 0 : i32
    %c0_i32_1 = arith.constant 0 : i32
    return %arg0, %c0_i32, %c0_i32_0 : i32, i32, i32
  }
  func.func @transform_1(%arg0: i32) -> (i32, i32) {
    %c0_i32 = arith.constant 0 : i32
    %c0_i32_0 = arith.constant 0 : i32
    %c0_i32_1 = arith.constant 0 : i32
    return %c0_i32, %c0_i32_0 : i32, i32
  }
  func.func @transform_2(%arg0: i32) -> (i32, i32) {
    %c0_i32 = arith.constant 0 : i32
    %c0_i32_0 = arith.constant 0 : i32
    %c0_i32_1 = arith.constant 0 : i32
    return %c0_i32, %c0_i32_0 : i32, i32
  }
  func.func @transform_3(%arg0: i32) -> (i32, i32) {
    %c0_i32 = arith.constant 0 : i32
    %c0_i32_0 = arith.constant 0 : i32
    %c0_i32_1 = arith.constant 0 : i32
    return %c0_i32, %c0_i32_0 : i32, i32
  }
  func.func @transform_4(%arg0: i32) -> (i32, i32) {
    %c0_i32 = arith.constant 0 : i32
    %c0_i32_0 = arith.constant 0 : i32
    %c0_i32_1 = arith.constant 0 : i32
    return %c0_i32, %c0_i32_0 : i32, i32
  }
  func.func @transform_5(%arg0: i32) -> (i32, i32, i32) {
    %c0_i32 = arith.constant 0 : i32
    %c0_i32_0 = arith.constant 0 : i32
    %c0_i32_1 = arith.constant 0 : i32
    return %arg0, %c0_i32, %c0_i32_0 : i32, i32, i32
  }
}

</mosaic_0001>

<llo_original>
// kernel: tpu_custom_call.1
$region0: #{tpu_custom_call.1}
  #allocation0 [shape = 'u32[]', space=smem, size = 0x4, offset = 0x4, fixed_abs, tag = 'smem constant byte address 0x4 - core index']
  #allocation1 [shape = 'u32[144,128]{1,0:T(1,128)}', space=vmem, size = 0x12000, scoped, tag = 'internal scratch']
  %s0 = inlined_call_operand.hbm [shape: f32[2,8,256], index: 0, kind: input, shape index: {}]
  %s1 = inlined_call_operand.vmem [shape: f32[8,2], index: 1, kind: input, shape index: {}]
  %s2 = inlined_call_operand.vmem [shape: f32[1,2], index: 2, kind: input, shape index: {}]
  %s3 = inlined_call_operand.vmem [shape: f32[2,8], index: 3, kind: input, shape index: {}]
  %s4 = inlined_call_operand.vmem [shape: f32[1,8], index: 4, kind: input, shape index: {}]
  %s5 = inlined_call_operand.hbm [shape: f32[2,8,256], index: 5, kind: output, shape index: {}]
  %s6 = sld [smem:[#allocation0]]
  $region57: #{tpu_custom_call.1} parent=0
    _
  %s8 = ssub.s32 1, %s6
  %s9 = scalar_select 0, %s8, %s6
  $region1: #{tpu_custom_call.1} parent=0
    #allocation2 [shape = 'u8[16384]{0}', space=vmem, size = 0x4000, scoped, tag = 'input window, operand 0']
    #allocation3 [shape = 's32[2]{0}', space=sflag, size = 0x8, scoped, tag = 'scoped memory for tpu_custom_call.1']
    #allocation4 [shape = 's32[2]{0}', space=sflag, size = 0x8, scoped, tag = 'scoped memory for tpu_custom_call.1']
    #allocation5 [shape = 'u8[16384]{0}', space=vmem, size = 0x4000, scoped, tag = 'output window, operand 0']
    %10 = vsyncpa [#allocation3], 0
    %s11 = scalar_lea.sflag [#allocation3], 1
    %12 = vsyncpa %s11, 0
    %13 = vsyncpa [#allocation4], 0
    %s14 = scalar_lea.sflag [#allocation4], 1
    %15 = vsyncpa %s14, 0
    loop: start=0, step=1, limit=4
    $region2: #{tpu_custom_call.1} parent=1 // loop_pre_header
      _
    $region3: #{tpu_custom_call.1} parent=1 // loop_header
      %s17 = sphi 0, %s21
      %p18 = scmp.ge.s32.totalorder %s17, 4
      %s27 = sphi 0, %s29
      %s30 = sphi 0, %s27
      %s31 = sphi 0, %s30
      %s47 = sphi 0, %s31
      %s51 = sphi 0, %s51
      %s53 = sphi 0, %s51
      %s54 = sphi 0, %s53
      %s68 = sphi 0, %s54
      %s72 = sphi 0, %s72
      %s74 = sphi 0, %s72
      %s75 = sphi 0, %s74
      %s89 = sphi 0, %s75
      %s93 = sphi 0, %s93
      %s95 = sphi 0, %s93
      %s96 = sphi 0, %s95
      %s110 = sphi 0, %s96
      %s114 = sphi 0, %s114
      %s116 = sphi 0, %s114
      %s117 = sphi 0, %s116
      %s131 = sphi 0, %s117
      %s137 = sphi 0, %s139
      %s140 = sphi 0, %s137
      %s141 = sphi 0, %s140
      %s157 = sphi 0, %s141
    $region4: #{tpu_custom_call.1} parent=1 // loop_header_branch
      %20 = sbr.rel (%p18) target = $region8
    $region5: #{tpu_custom_call.1} parent=1 // loop_body
      %s22 = ssub.s32 %s17, 1
      %s23 = ssub.s32 %s17, 2
      %s24 = sadd.s32 %s17, 1
      %s25 = ssub.s32 %s17, %s24
      %p26 = scmp.eq.s32.totalorder %s25, 0
      %s28 = sadd.s32 %s27, 1
      %s29 = scalar_select %p26, %s27, %s28
      %p32 = pneg %p26
      %p33 = scmp.eq.s32.totalorder %s17, 1
      %p34 = por %p32, %p33
      %p35 = scmp.ne.s32.totalorder %s27, %s30
      %p36 = scmp.eq.s32.totalorder %s17, 0
      %p37 = por %p35, %p36
      %p38 = scmp.ne.s32.totalorder %s27, %s30
      %p39 = scmp.eq.s32.totalorder %s22, 1
      %p40 = por %p38, %p39
      %p41 = scmp.ne.s32.totalorder %s30, %s31
      %p42 = scmp.eq.s32.totalorder %s22, 0
      %p43 = por %p41, %p42
      %p44 = scmp.ne.s32.totalorder %s30, %s31
      %p45 = scmp.eq.s32.totalorder %s23, 1
      %p46 = por %p44, %p45
      %p48 = scmp.ne.s32.totalorder %s31, %s47
      %p49 = scmp.eq.s32.totalorder %s23, 0
      %p50 = por %p48, %p49
      %s52 = sadd.s32 %s51, 1
      %p55 = scmp.eq.s32.totalorder %s17, 1
      %p56 = scmp.ne.s32.totalorder %s51, %s53
      %p57 = scmp.eq.s32.totalorder %s17, 0
      %p58 = por %p56, %p57
      %p59 = scmp.ne.s32.totalorder %s51, %s53
      %p60 = scmp.eq.s32.totalorder %s22, 1
      %p61 = por %p59, %p60
      %p62 = scmp.ne.s32.totalorder %s53, %s54
      %p63 = scmp.eq.s32.totalorder %s22, 0
      %p64 = por %p62, %p63
      %p65 = scmp.ne.s32.totalorder %s53, %s54
      %p66 = scmp.eq.s32.totalorder %s23, 1
      %p67 = por %p65, %p66
      %p69 = scmp.ne.s32.totalorder %s54, %s68
      %p70 = scmp.eq.s32.totalorder %s23, 0
      %p71 = por %p69, %p70
      %s73 = sadd.s32 %s72, 1
      %p76 = scmp.eq.s32.totalorder %s17, 1
      %p77 = scmp.ne.s32.totalorder %s72, %s74
      %p78 = scmp.eq.s32.totalorder %s17, 0
      %p79 = por %p77, %p78
      %p80 = scmp.ne.s32.totalorder %s72, %s74
      %p81 = scmp.eq.s32.totalorder %s22, 1
      %p82 = por %p80, %p81
      %p83 = scmp.ne.s32.totalorder %s74, %s75
      %p84 = scmp.eq.s32.totalorder %s22, 0
      %p85 = por %p83, %p84
      %p86 = scmp.ne.s32.totalorder %s74, %s75
      %p87 = scmp.eq.s32.totalorder %s23, 1
      %p88 = por %p86, %p87
      %p90 = scmp.ne.s32.totalorder %s75, %s89
      %p91 = scmp.eq.s32.totalorder %s23, 0
      %p92 = por %p90, %p91
      %s94 = sadd.s32 %s93, 1
      %p97 = scmp.eq.s32.totalorder %s17, 1
      %p98 = scmp.ne.s32.totalorder %s93, %s95
      %p99 = scmp.eq.s32.totalorder %s17, 0
      %p100 = por %p98, %p99
      %p101 = scmp.ne.s32.totalorder %s93, %s95
      %p102 = scmp.eq.s32.totalorder %s22, 1
      %p103 = por %p101, %p102
      %p104 = scmp.ne.s32.totalorder %s95, %s96
      %p105 = scmp.eq.s32.totalorder %s22, 0
      %p106 = por %p104, %p105
      %p107 = scmp.ne.s32.totalorder %s95, %s96
      %p108 = scmp.eq.s32.totalorder %s23, 1
      %p109 = por %p107, %p108
      %p111 = scmp.ne.s32.totalorder %s96, %s110
      %p112 = scmp.eq.s32.totalorder %s23, 0
      %p113 = por %p111, %p112
      %s115 = sadd.s32 %s114, 1
      %p118 = scmp.eq.s32.totalorder %s17, 1
      %p119 = scmp.ne.s32.totalorder %s114, %s116
      %p120 = scmp.eq.s32.totalorder %s17, 0
      %p121 = por %p119, %p120
      %p122 = scmp.ne.s32.totalorder %s114, %s116
      %p123 = scmp.eq.s32.totalorder %s22, 1
      %p124 = por %p122, %p123
      %p125 = scmp.ne.s32.totalorder %s116, %s117
      %p126 = scmp.eq.s32.totalorder %s22, 0
      %p127 = por %p125, %p126
      %p128 = scmp.ne.s32.totalorder %s116, %s117
      %p129 = scmp.eq.s32.totalorder %s23, 1
      %p130 = por %p128, %p129
      %p132 = scmp.ne.s32.totalorder %s117, %s131
      %p133 = scmp.eq.s32.totalorder %s23, 0
      %p134 = por %p132, %p133
      %s135 = ssub.s32 %s17, %s24
      %p136 = scmp.eq.s32.totalorder %s135, 0
      %s138 = sadd.s32 %s137, 1
      %s139 = scalar_select %p136, %s137, %s138
      %p142 = pneg %p136
      %p143 = scmp.eq.s32.totalorder %s17, 1
      %p144 = por %p142, %p143
      %p145 = scmp.ne.s32.totalorder %s137, %s140
      %p146 = scmp.eq.s32.totalorder %s17, 0
      %p147 = por %p145, %p146
      %p148 = scmp.ne.s32.totalorder %s137, %s140
      %p149 = scmp.eq.s32.totalorder %s22, 1
      %p150 = por %p148, %p149
      %p151 = scmp.ne.s32.totalorder %s140, %s141
      %p152 = scmp.eq.s32.totalorder %s22, 0
      %p153 = por %p151, %p152
      %p154 = scmp.ne.s32.totalorder %s140, %s141
      %p155 = scmp.eq.s32.totalorder %s23, 1
      %p156 = por %p154, %p155
      %p158 = scmp.ne.s32.totalorder %s141, %s157
      %p159 = scmp.eq.s32.totalorder %s23, 0
      %p160 = por %p158, %p159
      %p161 = scmp.le.s32.totalorder 1, %s17
      %p162 = scmp.lt.s32.totalorder %s17, 3
      %p163 = pnand %p161, %p162
      %p164 = pneg %p163
      // Predicated region
      $region9: #{tpu_custom_call.1} parent=5 // pred_check
        _
      $region10: #{tpu_custom_call.1} parent=5 // pred_check_branch
        %166 = sbr.rel (%p163) target = $region12
      $region11: #{tpu_custom_call.1} parent=5 // pred_region
        %s167 = ssub.s32 %s17, 1
        // Predicated region
        $region13: #{tpu_custom_call.1} parent=11 // pred_check
          %p168 = pneg %p64
        $region14: #{tpu_custom_call.1} parent=11 // pred_check_branch
          %170 = sbr.rel (%p168) target = $region16
        $region15: #{tpu_custom_call.1} parent=11 // pred_region
          _
        $region16: #{tpu_custom_call.1} parent=11 // pred_fallthru
          _
        // Predicated region
        $region17: #{tpu_custom_call.1} parent=11 // pred_check
          %p171 = pneg %p85
        $region18: #{tpu_custom_call.1} parent=11 // pred_check_branch
          %173 = sbr.rel (%p171) target = $region20
        $region19: #{tpu_custom_call.1} parent=11 // pred_region
          _
        $region20: #{tpu_custom_call.1} parent=11 // pred_fallthru
          _
        // Predicated region
        $region21: #{tpu_custom_call.1} parent=11 // pred_check
          %p174 = pneg %p106
        $region22: #{tpu_custom_call.1} parent=11 // pred_check_branch
          %176 = sbr.rel (%p174) target = $region24
        $region23: #{tpu_custom_call.1} parent=11 // pred_region
          _
        $region24: #{tpu_custom_call.1} parent=11 // pred_fallthru
          _
        // Predicated region
        $region25: #{tpu_custom_call.1} parent=11 // pred_check
          %p177 = pneg %p127
        $region26: #{tpu_custom_call.1} parent=11 // pred_check_branch
          %179 = sbr.rel (%p177) target = $region28
        $region27: #{tpu_custom_call.1} parent=11 // pred_region
          _
        $region28: #{tpu_custom_call.1} parent=11 // pred_fallthru
          _
      $region12: #{tpu_custom_call.1} parent=5 // pred_fallthru
        _
      %p180 = scmp.lt.s32.totalorder %s17, 2
      // Predicated region
      $region29: #{tpu_custom_call.1} parent=5 // pred_check
        %p181 = pneg %p180
      $region30: #{tpu_custom_call.1} parent=5 // pred_check_branch
        %183 = sbr.rel (%p181) target = $region32
      $region31: #{tpu_custom_call.1} parent=5 // pred_region
        // Predicated region
        $region33: #{tpu_custom_call.1} parent=31 // pred_check
          %p184 = pneg %p37
        $region34: #{tpu_custom_call.1} parent=31 // pred_check_branch
          %186 = sbr.rel (%p184) target = $region36
        $region35: #{tpu_custom_call.1} parent=31 // pred_region
          %s187 = sand.u32 %s27, 1
          %s188 = scalar_lea.sflag [#allocation3], %s187
          %s189 = sand.u32 %s27, 1
          %s190 = smul.addr %s189, 16
          %s191 = scalar_lea.vmem [#allocation2], %s190
          %s193 = ssub.s32 256, 256
          %194 = vsyncadd %s188, %s193
          %s195 = smul.addr %s17, 2
          %s196 = smul.addr %s195, 128
          %s197 = scalar_lea.hbm %s0, %s196
          %s199 = sshll.u32 %s191, 4
          %s200 = int_to_ptr.vmem [resolvable:$true] %s199
          %202 = dma.hbm_to_vmem [thread:$0]  %s197, 256, %s200, %s188
        $region36: #{tpu_custom_call.1} parent=31 // pred_fallthru
          _
      $region32: #{tpu_custom_call.1} parent=5 // pred_fallthru
        _
      %p203 = scmp.le.s32.totalorder 1, %s17
      %p204 = scmp.lt.s32.totalorder %s17, 3
      %p205 = pnand %p203, %p204
      %p206 = pneg %p205
      // Predicated region
      $region37: #{tpu_custom_call.1} parent=5 // pred_check
        _
      $region38: #{tpu_custom_call.1} parent=5 // pred_check_branch
        %208 = sbr.rel (%p205) target = $region40
      $region39: #{tpu_custom_call.1} parent=5 // pred_region
        %s209 = ssub.s32 %s17, 1
        %s210 = sand.u32 %s30, 1
        %s211 = scalar_lea.sflag [#allocation3], %s210
        %s212 = sand.u32 %s30, 1
        %s213 = smul.addr %s212, 16
        %s214 = scalar_lea.vmem [#allocation2], %s213
        // Predicated region
        $region41: #{tpu_custom_call.1} parent=39 // pred_check
          %p215 = pneg %p43
        $region42: #{tpu_custom_call.1} parent=39 // pred_check_branch
          %217 = sbr.rel (%p215) target = $region44
        $region43: #{tpu_custom_call.1} parent=39 // pred_region
          %218 = dma.done %s211, 256
        $region44: #{tpu_custom_call.1} parent=39 // pred_fallthru
          _
        %s219 = sand.u32 %s30, 1
        %s220 = scalar_lea.sflag [#allocation3], %s219
        %s221 = sand.u32 %s30, 1
        %s222 = smul.addr %s221, 16
        %s223 = scalar_lea.vmem [#allocation2], %s222
        %p224 = pneg %p43
        %p225 = pneg %p40
        %p226 = pneg %p64
        %p227 = pneg %p61
        %p228 = pneg %p85
        %p229 = pneg %p82
        %p230 = pneg %p106
        %p231 = pneg %p103
        %p232 = pneg %p127
        %p233 = pneg %p124
        %p234 = pneg %p153
        %p235 = pneg %p150
        %s236 = sand.u32 %s140, 1
        %s237 = scalar_lea.sflag [#allocation4], %s236
        %s238 = sand.u32 %s140, 1
        %s239 = smul.addr %s238, 16
        %s240 = scalar_lea.vmem [#allocation5], %s239
        %v241 = vld [vmem:[%s214] sm:$0xff]
        %v242 = vld [vmem:[%s214 + $0x8] sm:$0xff]
        %v243 = vadd.f32 %v241, %v242
        %244 = vadd.xlane.f32.xlu0 %v243
        %v245 = vpop.xlane.xlu0 %244
        %v246 = vmul.f32 %v245, 0.00390625
        %v247 = vmax.f32 %v241, %v242
        %248 = vmax.xlane.f32.xlu0 %v247
        %v249 = vpop.xlane.xlu0 %248
        %v251 = vlaneseq
        %v252 = vand.u32 %v251, 127
        %v253 = vlaneseq
        %v254 = vshrl.u32 %v253, 7
        %v255 = vsub.s32 %v252, %v254
        %v256 = vrot.slane %v249, %v255
        %v259 = vlaneseq
        %v260 = vshrl.u32 %v259, 7
        %v261 = vsub.s32 %v252, %v260
        %v262 = vrot.slane %v246, %v261
        %vm264 = vcmask 1040384
        %v265 = vsel %vm264, %v256, %v262
        %v266 = vld [vmem:[%s1] sm:$0xff]
        %v267 = vld [vmem:[%s2] sm:$0x1]
        %v268 = vld [vmem:[%s3] sm:$0x3]
        %v269 = vld [vmem:[%s4] sm:$0x1]
        %v271 = vlaneseq
        %v272 = vshrl.u32 %v271, 7
        %v273 = vsub.s32 0, %v272
        %v274 = vrot.slane %v267, %v273
        %vm276 = vcmask 64512
        %v278 = vsel %vm276, %v265, 0
        %280 = vmatprep.subr.mxu0 0.0
        %281 = vmatpush1.msra.mxu0 %v266
        %282 = vmatprep.subr.mxu0 0.0
        %283 = vmatpush1.msra.mxu0 0.0
        %284 = vmatprep.subr.mxu0 0.0
        %285 = vmatpush1.msra.mxu0 0.0
        %286 = vmatprep.subr.mxu0 0.0
        %287 = vmatpush1.msra.mxu0 0.0
        %288 = vmatprep.subr.mxu0 0.0
        %289 = vmatpush1.msra.mxu0 0.0
        %290 = vmatprep.subr.mxu0 0.0
        %291 = vmatpush1.msra.mxu0 0.0
        %292 = vmatprep.subr.mxu0 0.0
        %293 = vmatpush1.msra.mxu0 0.0
        %294 = vmatprep.subr.mxu0 0.0
        %295 = vmatpush1.msra.mxu0 0.0
        %296 = vmatprep.subr.mxu0 0.0
        %297 = vmatpush1.msra.mxu0 0.0
        %298 = vmatprep.subr.mxu0 0.0
        %299 = vmatpush1.msra.mxu0 0.0
        %300 = vmatprep.subr.mxu0 0.0
        %301 = vmatpush1.msra.mxu0 0.0
        %302 = vmatprep.subr.mxu0 0.0
        %303 = vmatpush1.msra.mxu0 0.0
        %304 = vmatprep.subr.mxu0 0.0
        %305 = vmatpush1.msra.mxu0 0.0
        %306 = vmatprep.subr.mxu0 0.0
        %307 = vmatpush1.msra.mxu0 0.0
        %308 = vmatprep.subr.mxu0 0.0
        %309 = vmatpush1.msra.mxu0 0.0
        %310 = vmatprep.subr.mxu0 0.0
        %311 = vmatpush1.msra.mxu0 0.0
        %312 = vmatprep.subr.mxu0 0.0
        %313 = vmatpush1.msra.mxu0 0.0
        %314 = vmatprep.subr.mxu0 0.0
        %315 = vmatpush1.msra.mxu0 0.0
        %316 = vmatprep.subr.mxu0 0.0
        %317 = vmatpush1.msra.mxu0 0.0
        %318 = vmatprep.subr.mxu0 0.0
        %319 = vmatpush1.msra.mxu0 0.0
        %320 = vmatprep.subr.mxu0 0.0
        %321 = vmatpush1.msra.mxu0 0.0
        %322 = vmatprep.subr.mxu0 0.0
        %323 = vmatpush1.msra.mxu0 0.0
        %324 = vmatprep.subr.mxu0 0.0
        %325 = vmatpush1.msra.mxu0 0.0
        %326 = vmatprep.subr.mxu0 0.0
        %327 = vmatpush1.msra.mxu0 0.0
        %328 = vmatprep.subr.mxu0 0.0
        %329 = vmatpush1.msra.mxu0 0.0
        %330 = vmatprep.subr.mxu0 0.0
        %331 = vmatpush1.msra.mxu0 0.0
        %332 = vmatprep.subr.mxu0 0.0
        %333 = vmatpush1.msra.mxu0 0.0
        %334 = vmatprep.subr.mxu0 0.0
        %335 = vmatpush1.msra.mxu0 0.0
        %336 = vmatprep.subr.mxu0 0.0
        %337 = vmatpush1.msra.mxu0 0.0
        %338 = vmatprep.subr.mxu0 0.0
        %339 = vmatpush1.msra.mxu0 0.0
        %340 = vmatprep.subr.mxu0 0.0
        %341 = vmatpush1.msra.mxu0 0.0
        %342 = vmatprep.subr.mxu0 0.0
        %343 = vmatpush1.msra.mxu0 0.0
        %344 = vmatprep.mubr.f32.mxu0 0.0
        %345 = vmatmul.mubr.f32.gmra.mrb[0].mxu0 %v278
        %v346 = vpop.f32.mrb[0].mxu0
        %v347 = vadd.f32 %v274, %v346
        %v348 = vpop.f32.mrb[0].mxu0
        %349 = vdwg.mxu0
        %v350 = vmax.f32 %v347, 0.0
        %v352 = vlaneseq
        %v353 = vshrl.u32 %v352, 7
        %v354 = vsub.s32 0, %v353
        %v355 = vrot.slane %v269, %v354
        %vm357 = vcmask 15360
        %v359 = vsel %vm357, %v350, 0
        %vm361 = vcmask 1041408
        %v363 = vsel %vm361, %v268, 0
        %365 = vmatprep.subr.mxu0 0.0
        %366 = vmatpush1.msra.mxu0 %v363
        %367 = vmatprep.subr.mxu0 0.0
        %368 = vmatpush1.msra.mxu0 0.0
        %369 = vmatprep.subr.mxu0 0.0
        %370 = vmatpush1.msra.mxu0 0.0
        %371 = vmatprep.subr.mxu0 0.0
        %372 = vmatpush1.msra.mxu0 0.0
        %373 = vmatprep.subr.mxu0 0.0
        %374 = vmatpush1.msra.mxu0 0.0
        %375 = vmatprep.subr.mxu0 0.0
        %376 = vmatpush1.msra.mxu0 0.0
        %377 = vmatprep.subr.mxu0 0.0
        %378 = vmatpush1.msra.mxu0 0.0
        %379 = vmatprep.subr.mxu0 0.0
        %380 = vmatpush1.msra.mxu0 0.0
        %381 = vmatprep.subr.mxu0 0.0
        %382 = vmatpush1.msra.mxu0 0.0
        %383 = vmatprep.subr.mxu0 0.0
        %384 = vmatpush1.msra.mxu0 0.0
        %385 = vmatprep.subr.mxu0 0.0
        %386 = vmatpush1.msra.mxu0 0.0
        %387 = vmatprep.subr.mxu0 0.0
        %388 = vmatpush1.msra.mxu0 0.0
        %389 = vmatprep.subr.mxu0 0.0
        %390 = vmatpush1.msra.mxu0 0.0
        %391 = vmatprep.subr.mxu0 0.0
        %392 = vmatpush1.msra.mxu0 0.0
        %393 = vmatprep.subr.mxu0 0.0
        %394 = vmatpush1.msra.mxu0 0.0
        %395 = vmatprep.subr.mxu0 0.0
        %396 = vmatpush1.msra.mxu0 0.0
        %397 = vmatprep.subr.mxu0 0.0
        %398 = vmatpush1.msra.mxu0 0.0
        %399 = vmatprep.subr.mxu0 0.0
        %400 = vmatpush1.msra.mxu0 0.0
        %401 = vmatprep.subr.mxu0 0.0
        %402 = vmatpush1.msra.mxu0 0.0
        %403 = vmatprep.subr.mxu0 0.0
        %404 = vmatpush1.msra.mxu0 0.0
        %405 = vmatprep.subr.mxu0 0.0
        %406 = vmatpush1.msra.mxu0 0.0
        %407 = vmatprep.subr.mxu0 0.0
        %408 = vmatpush1.msra.mxu0 0.0
        %409 = vmatprep.subr.mxu0 0.0
        %410 = vmatpush1.msra.mxu0 0.0
        %411 = vmatprep.subr.mxu0 0.0
        %412 = vmatpush1.msra.mxu0 0.0
        %413 = vmatprep.subr.mxu0 0.0
        %414 = vmatpush1.msra.mxu0 0.0
        %415 = vmatprep.subr.mxu0 0.0
        %416 = vmatpush1.msra.mxu0 0.0
        %417 = vmatprep.subr.mxu0 0.0
        %418 = vmatpush1.msra.mxu0 0.0
        %419 = vmatprep.subr.mxu0 0.0
        %420 = vmatpush1.msra.mxu0 0.0
        %421 = vmatprep.subr.mxu0 0.0
        %422 = vmatpush1.msra.mxu0 0.0
        %423 = vmatprep.subr.mxu0 0.0
        %424 = vmatpush1.msra.mxu0 0.0
        %425 = vmatprep.subr.mxu0 0.0
        %426 = vmatpush1.msra.mxu0 0.0
        %427 = vmatprep.subr.mxu0 0.0
        %428 = vmatpush1.msra.mxu0 0.0
        %429 = vmatprep.mubr.f32.mxu0 0.0
        %430 = vmatmul.mubr.f32.gmra.mrb[0].mxu0 %v359
        %v431 = vpop.f32.mrb[0].mxu0
        %v432 = vadd.f32 %v355, %v431
        %v433 = vpop.f32.mrb[0].mxu0
        %434 = vdwg.mxu0
        %v436 = vrot.slane %v432, 1
        %v438 = vadd.f32 %v432, %v436
        %v439 = vxor.u32 %v438, 2147483648
        %v440 = vmul.f32 %v439, 1.442695
        %v441 = vpow.pop %v440
        %v442 = vadd.f32 %v441, 1.0
        %v443 = vrcp.pop %v442
        %v444 = vmul.f32 1.0, %v443
        %v445 = vlaneseq
        %v446 = vshrl.u32 %v445, 7
        %v447 = vsub.s32 0, %v446
        %v448 = vrot.slane %v444, %v447
        %450 = vbcast.lane.b32.xlu0 %v448, 256
        %v451 = vpop.permute.xlu0 %450
        %v452 = vmul.f32 %v451, %v241
        %v453 = vmul.f32 %v451, %v242
        %454 = vst [vmem:[%s240] sm:$0xff] %v452
        %455 = vst [vmem:[%s240 + $0x8] sm:$0xff] %v453
        %s456 = sand.u32 %s140, 1
        %s457 = scalar_lea.sflag [#allocation4], %s456
        %s458 = sand.u32 %s140, 1
        %s459 = smul.addr %s458, 16
        %s460 = scalar_lea.vmem [#allocation5], %s459
        // Predicated region
        $region45: #{tpu_custom_call.1} parent=39 // pred_check
          %p461 = pneg %p150
        $region46: #{tpu_custom_call.1} parent=39 // pred_check_branch
          %463 = sbr.rel (%p461) target = $region48
        $region47: #{tpu_custom_call.1} parent=39 // pred_region
          %s465 = ssub.s32 256, 256
          %466 = vsyncadd %s457, %s465
          %s467 = smul.addr %s22, 2
          %s468 = smul.addr %s467, 128
          %s469 = scalar_lea.hbm %s5, %s468
          %s471 = sshll.u32 %s460, 4
          %s472 = int_to_ptr.vmem [resolvable:$true] %s471
          %474 = dma.vmem_to_hbm [thread:$0]  %s472, 256, %s469, %s457
        $region48: #{tpu_custom_call.1} parent=39 // pred_fallthru
          _
      $region40: #{tpu_custom_call.1} parent=5 // pred_fallthru
        _
      %p475 = scmp.le.s32.totalorder 2, %s17
      // Predicated region
      $region49: #{tpu_custom_call.1} parent=5 // pred_check
        %p476 = pneg %p475
      $region50: #{tpu_custom_call.1} parent=5 // pred_check_branch
        %478 = sbr.rel (%p476) target = $region52
      $region51: #{tpu_custom_call.1} parent=5 // pred_region
        %s479 = ssub.s32 %s17, 2
        // Predicated region
        $region53: #{tpu_custom_call.1} parent=51 // pred_check
          %p480 = pneg %p156
        $region54: #{tpu_custom_call.1} parent=51 // pred_check_branch
          %482 = sbr.rel (%p480) target = $region56
        $region55: #{tpu_custom_call.1} parent=51 // pred_region
          %s483 = sand.u32 %s141, 1
          %s484 = scalar_lea.sflag [#allocation4], %s483
          %s485 = sand.u32 %s141, 1
          %s486 = smul.addr %s485, 16
          %s487 = scalar_lea.vmem [#allocation5], %s486
          %488 = dma.done %s484, 256
        $region56: #{tpu_custom_call.1} parent=51 // pred_fallthru
          _
      $region52: #{tpu_custom_call.1} parent=5 // pred_fallthru
        _
    $region6: #{tpu_custom_call.1} parent=1 // loop_footer
      %s21 = sadd.s32 1, %s17
    $region7: #{tpu_custom_call.1} parent=1 // loop_footer_branch
      %16 = sbr.rel target = $region3
    $region8: #{tpu_custom_call.1} parent=1 // loop_exit
      _
    %489 = vsyncpa [#allocation3], 1
    %s490 = scalar_lea.sflag [#allocation3], 1
    %491 = vsyncpa %s490, 1
    %492 = vsyncpa [#allocation4], 1
    %s493 = scalar_lea.sflag [#allocation4], 1
    %494 = vsyncpa %s493, 1

</llo_original>
